<compile_context>
chip_gen: v5e
topology: v5e:2x2
jax: 0.10.0
libtpu: 0.0.40
codegen_flags: <defaults>
</compile_context>

<pallas_src>
import math

import jax
import jax.numpy as jnp
from jax.experimental import pallas as pl
from jax.experimental.pallas import tpu as pltpu

_LANE = 128
_MIB = 1024 * 1024


def _drop_path_kernel(m_ref, x_ref, o_ref):
    # m_ref: (TB, 1) per-row keep/scale factor; x_ref / o_ref: (TB, TN) tiles.
    o_ref[...] = x_ref[...] * m_ref[...]


def _largest_divisor(total, desired):
    """Largest d with 1 <= d <= desired and total % d == 0 (trace-time ints)."""
    d = max(1, min(int(desired), int(total)))
    while total % d:
        d -= 1
    return d


def _vmem_budget_bytes():
    """Scoped-VMEM budget derived from the actual chip (v7x has only 64 MiB)."""
    try:
        cap = int(pltpu.get_tpu_info().vmem_capacity_bytes)
    except Exception:  # conservative fallback if the query is unavailable
        cap = 64 * _MIB
    return min(64 * _MIB, cap // 2)


def drop_path_pallas(x, drop_prob=0.0, *, training=False, scale_by_keep=True,
                     rng_key=None, donate_input=False, min_pallas_bytes=_MIB):
    """JAX/Pallas equivalent of basicsr DropPath.forward (any rank, dim 0 = batch).

    donate_input: set True only if x is dead after this call (donated into jit);
      otherwise XLA inserts a full HBM copy to preserve x, doubling traffic.
    min_pallas_bytes: inputs smaller than this use a plain fused XLA multiply.
    """
    if drop_prob == 0.0 or not training:
        return x  # identity path, same as the PyTorch module

    keep_prob = 1.0 - drop_prob
    if rng_key is None:
        rng_key = jax.random.PRNGKey(0)

    orig_shape = x.shape
    B = orig_shape[0]
    N = math.prod(orig_shape[1:]) if len(orig_shape) > 1 else 1
    if B == 0 or N == 0:
        return x

    dtype = x.dtype
    itemsize = jnp.dtype(dtype).itemsize

    # Per-sample keep/scale factor (only B values), hoisted out of the hot loop.
    keep = jax.random.bernoulli(rng_key, p=keep_prob, shape=(B, 1))
    scale = (1.0 / keep_prob) if (keep_prob > 0.0 and scale_by_keep) else 1.0
    mask = keep.astype(dtype) * jnp.asarray(scale, dtype=dtype)

    x2d = x.reshape(B, N)

    # Fast path: for small tensors the fixed pallas_call/grid/DMA setup cost
    # dominates -- a fused XLA multiply is strictly faster.
    if B * N * itemsize < min_pallas_bytes:
        return (x2d * mask).reshape(orig_shape)

    # dtype-dependent sublane packing: f32 -> 8, bf16/f16 -> 16, int8/fp8 -> 32.
    sub = max(8, 32 // itemsize)

    # Small-batch sublane packing: fold part of the feature axis into rows so
    # every vreg sublane is occupied (the mask is repeated per folded row).
    R = 1
    if B < sub and N >= sub * _LANE:
        R = sub // math.gcd(B, sub)      # power of two; B*R is a multiple of sub
    B2 = B * R
    N2 = -(-N // R)                      # features per (folded) row

    # Pad only up to hardware alignment; tiles are exact divisors of the padded
    # dims so no grid cell is a partial block (avoids masked vst.msk stores).
    B2p = -(-B2 // sub) * sub
    N2p = -(-N2 // _LANE) * _LANE

    # Joint tile sizing: target ~1-4 MiB activation tiles (HBM-roofline knee),
    # budgeted against the chip's real VMEM (double-buffered in+out = 4 tiles).
    vmem_limit = _vmem_budget_bytes()
    tile_cap = min(4 * _MIB, vmem_limit // 8)
    cap_elems = max(sub * _LANE, tile_cap // itemsize)

    n_units = N2p // _LANE
    tn_units = _largest_divisor(n_units, max(1, (cap_elems // sub) // _LANE))
    TN = tn_units * _LANE

    b_units = B2p // sub
    tb_units = _largest_divisor(b_units, max(1, (cap_elems // TN) // sub))
    # v7x megacore: make sure the leading (parallel) axis has >=2 blocks so
    # both TensorCores stream HBM; harmless on single-TC v5e/v6e.
    if b_units // tb_units < 2 and b_units >= 2:
        tb_units = _largest_divisor(b_units, b_units // 2)
    TB = tb_units * sub

    # Feature tiles innermost: the (TB, 1) mask block stays resident across j.
    grid = (B2p // TB, N2p // TN)

    # Build the padded / folded 2-D operands (all no-ops for aligned shapes).
    flat_pad = R * N2p - N
    if flat_pad:
        x2d = jnp.pad(x2d, ((0, 0), (0, flat_pad)))
    if R > 1:
        x2d = x2d.reshape(B2, N2p)
        mask2 = jnp.repeat(mask, R, axis=0)
    else:
        mask2 = mask
    if B2p != B2:
        x2d = jnp.pad(x2d, ((0, B2p - B2), (0, 0)))
        mask2 = jnp.pad(mask2, ((0, B2p - B2), (0, 0)))

    out2d = pl.pallas_call(
        _drop_path_kernel,
        out_shape=jax.ShapeDtypeStruct((B2p, N2p), dtype),
        grid=grid,
        in_specs=[
            pl.BlockSpec((TB, 1), lambda i, j: (i, 0)),    # per-row mask
            pl.BlockSpec((TB, TN), lambda i, j: (i, j)),   # activation tile
        ],
        out_specs=pl.BlockSpec((TB, TN), lambda i, j: (i, j)),
        input_output_aliases=({1: 0} if donate_input else {}),
        compiler_params=pltpu.CompilerParams(
            dimension_semantics=("parallel", "parallel"),
            vmem_limit_bytes=int(vmem_limit)),
    )(mask2, x2d)

    # Undo padding / folding.
    out2d = out2d[:B2]
    if R > 1 or flat_pad:
        out2d = out2d.reshape(B, R * N2p)[:, :N]
    return out2d.reshape(orig_shape)


if __name__ == "__main__":
    key = jax.random.PRNGKey(0)
    # NCHW input, small shapes consistent with the module.
    x = jax.random.normal(key, (2, 4, 16, 16), dtype=jnp.float32)

    drop_prob = 0.3
    keep_prob = 1.0 - drop_prob
    mask_key = jax.random.PRNGKey(1234)

    # training=True, forced through the Pallas kernel (bypass small-input fast path).
    out = drop_path_pallas(x, drop_prob, training=True, scale_by_keep=True,
                           rng_key=mask_key, min_pallas_bytes=0)
    out = jax.block_until_ready(out)

    # Auto path for this tiny input uses the fused XLA fast path -> same result.
    out_auto = jax.block_until_ready(
        drop_path_pallas(x, drop_prob, training=True, scale_by_keep=True,
                         rng_key=mask_key))
    assert jnp.allclose(out_auto, out, atol=1e-6)

    # eval path -> identity (no kernel).
    out_eval = jax.block_until_ready(drop_path_pallas(x, drop_prob, training=False))
    assert jnp.allclose(out_eval, x)

    # Semantics: each sample is fully dropped (zeros) or scaled by 1/keep_prob.
    for b in range(x.shape[0]):
        dropped = bool(jnp.allclose(out[b], 0.0))
        kept = bool(jnp.allclose(out[b], x[b] / keep_prob, atol=1e-5))
        assert dropped or kept, f"sample {b}: invalid drop-path output"

    # Unaligned bf16 input exercises the padding / dtype-aware tiling path.
    x2 = jax.random.normal(jax.random.PRNGKey(2), (5, 3, 10, 30), dtype=jnp.bfloat16)
    out2 = jax.block_until_ready(
        drop_path_pallas(x2, 0.5, training=True, rng_key=jax.random.PRNGKey(7),
                         min_pallas_bytes=0))
    assert out2.shape == x2.shape
    for b in range(x2.shape[0]):
        ref_kept = x2[b].astype(jnp.float32) * 2.0
        dropped = bool(jnp.allclose(out2[b].astype(jnp.float32), 0.0))
        kept = bool(jnp.allclose(out2[b].astype(jnp.float32), ref_kept,
                                 atol=1e-3, rtol=1e-3))
        assert dropped or kept, f"bf16 sample {b}: invalid drop-path output"

    print("KERNEL_OK")
</pallas_src>

<mosaic_0001>
module attributes {stable_mosaic.version = 11 : i64} {
  func.func @_drop_path_kernel(%arg0: i32, %arg1: i32, %arg2: memref<8x1xf32, #tpu.memory_space<vmem>>, %arg3: memref<8x256xf32, #tpu.memory_space<vmem>>, %arg4: memref<8x256xf32, #tpu.memory_space<vmem>>) attributes {dimension_semantics = [#tpu.dimension_semantics<parallel>, #tpu.dimension_semantics<parallel>], iteration_bounds = array<i64: 1, 1>, scalar_prefetch = 0 : i64, scratch_operands = 0 : i64, tpu.core_type = #tpu.core_type<tc>, window_params = [{transform_indices = @transform_0, window_bounds = array<i64: 8, 1>}, {transform_indices = @transform_1, window_bounds = array<i64: 8, 256>}, {transform_indices = @transform_2, window_bounds = array<i64: 8, 256>}]} {
    %c0 = arith.constant 0 : index
    %c0_0 = arith.constant 0 : index
    %0 = vector.load %arg3[%c0, %c0_0] : memref<8x256xf32, #tpu.memory_space<vmem>>, vector<8x256xf32>
    %c0_1 = arith.constant 0 : index
    %c0_2 = arith.constant 0 : index
    %1 = vector.load %arg2[%c0_1, %c0_2] : memref<8x1xf32, #tpu.memory_space<vmem>>, vector<8x1xf32>
    %2 = vector.broadcast %1 : vector<8x1xf32> to vector<8x256xf32>
    %3 = arith.mulf %0, %2 : vector<8x256xf32>
    %c0_3 = arith.constant 0 : index
    %c0_4 = arith.constant 0 : index
    %4 = vector.load %arg4[%c0_3, %c0_4] : memref<8x256xf32, #tpu.memory_space<vmem>>, vector<8x256xf32>
    tpu.vector_store %arg4[%c0_3, %c0_4], %3 {strides = array<i32>} : memref<8x256xf32, #tpu.memory_space<vmem>>, vector<8x256xf32>,
    return
  }
  func.func @transform_0(%arg0: i32, %arg1: i32) -> (i32, i32) {
    %c0_i32 = arith.constant 0 : i32
    %c0_i32_0 = arith.constant 0 : i32
    return %arg0, %c0_i32 : i32, i32
  }
  func.func @transform_1(%arg0: i32, %arg1: i32) -> (i32, i32) {
    %c0_i32 = arith.constant 0 : i32
    return %arg0, %arg1 : i32, i32
  }
  func.func @transform_2(%arg0: i32, %arg1: i32) -> (i32, i32) {
    %c0_i32 = arith.constant 0 : i32
    return %arg0, %arg1 : i32, i32
  }
}

</mosaic_0001>

<llo_original>
// kernel: tpu_custom_call.1
$region0: #{tpu_custom_call.1}
  #allocation0 [shape = 'u32[]', space=smem, size = 0x4, offset = 0x4, fixed_abs, tag = 'smem constant byte address 0x4 - core index']
  #allocation1 [shape = 'u32[72,128]{1,0:T(1,128)}', space=vmem, size = 0x9000, scoped, tag = 'internal scratch']
  %s0 = inlined_call_operand.vmem [shape: f32[8,1], index: 0, kind: input, shape index: {}]
  %s1 = inlined_call_operand.hbm [shape: f32[8,256], index: 1, kind: input, shape index: {}]
  %s2 = inlined_call_operand.hbm [shape: f32[8,256], index: 2, kind: output, shape index: {}]
  %s3 = sld [smem:[#allocation0]]
  $region22: #{tpu_custom_call.1} parent=0
    _
  %s5 = ssub.s32 1, %s3
  %s6 = scalar_select 0, %s5, %s3
  $region1: #{tpu_custom_call.1} parent=0
    #allocation2 [shape = 'u8[8192]{0}', space=vmem, size = 0x2000, scoped, tag = 'input window, operand 1, single buffered']
    #allocation3 [shape = 's32[1]{0}', space=sflag, size = 0x4, scoped, tag = 'scoped memory for tpu_custom_call.1']
    #allocation4 [shape = 's32[1]{0}', space=sflag, size = 0x4, scoped, tag = 'scoped memory for tpu_custom_call.1']
    #allocation5 [shape = 'u8[8192]{0}', space=vmem, size = 0x2000, scoped, tag = 'output window, operand 0, single buffered']
    %7 = vsyncpa [#allocation3], 0
    %8 = vsyncpa [#allocation4], 0
    // Predicated region
    $region2: #{tpu_custom_call.1} parent=1 // pred_check
      _
    $region3: #{tpu_custom_call.1} parent=1 // pred_check_branch
      %10 = sbr.rel (0) target = $region5
    $region4: #{tpu_custom_call.1} parent=1 // pred_region
      _
    $region5: #{tpu_custom_call.1} parent=1 // pred_fallthru
      _
    // Predicated region
    $region6: #{tpu_custom_call.1} parent=1 // pred_check
      _
    $region7: #{tpu_custom_call.1} parent=1 // pred_check_branch
      %12 = sbr.rel (0) target = $region9
    $region8: #{tpu_custom_call.1} parent=1 // pred_region
      %14 = vsyncadd [#allocation3], 0
      %s16 = sshll.u32 %s1, 4
      %s17 = int_to_ptr.hbm [resolvable:$true] %s16
      %s18 = sshll.u32 [#allocation2], 4
      %s19 = int_to_ptr.vmem [resolvable:$true] %s18
      %21 = dma.hbm_to_vmem [thread:$0]  %s17, 256, %s19, [#allocation3]
    $region9: #{tpu_custom_call.1} parent=1 // pred_fallthru
      _
    // Predicated region
    $region10: #{tpu_custom_call.1} parent=1 // pred_check
      _
    $region11: #{tpu_custom_call.1} parent=1 // pred_check_branch
      %23 = sbr.rel (0) target = $region13
    $region12: #{tpu_custom_call.1} parent=1 // pred_region
      %25 = dma.done [#allocation3], 256
    $region13: #{tpu_custom_call.1} parent=1 // pred_fallthru
      _
    %v26 = vld [vmem:[#allocation2] sm:$0xff]
    %v27 = vld [vmem:[#allocation2 + $0x8] sm:$0xff]
    %v28 = vld [vmem:[%s0] sm:$0xff]
    %30 = vset.pattern.permute.xlu0 0
    %31 = vperm.xlu0 %30, %v28
    %v32 = vpop.permute.xlu0 %31
    %v34 = vmul.f32 %v26, %v32
    %v35 = vmul.f32 %v27, %v32
    %36 = vst [vmem:[#allocation5] sm:$0xff] %v34
    %37 = vst [vmem:[#allocation5 + $0x8] sm:$0xff] %v35
    // Predicated region
    $region14: #{tpu_custom_call.1} parent=1 // pred_check
      _
    $region15: #{tpu_custom_call.1} parent=1 // pred_check_branch
      %39 = sbr.rel (0) target = $region17
    $region16: #{tpu_custom_call.1} parent=1 // pred_region
      %41 = vsyncadd [#allocation4], 0
      %s43 = sshll.u32 [#allocation5], 4
      %s44 = int_to_ptr.vmem [resolvable:$true] %s43
      %s45 = sshll.u32 %s2, 4
      %s46 = int_to_ptr.hbm [resolvable:$true] %s45
      %48 = dma.vmem_to_hbm [thread:$0]  %s44, 256, %s46, [#allocation4]
    $region17: #{tpu_custom_call.1} parent=1 // pred_fallthru
      _
    // Predicated region
    $region18: #{tpu_custom_call.1} parent=1 // pred_check
      _
    $region19: #{tpu_custom_call.1} parent=1 // pred_check_branch
      %50 = sbr.rel (0) target = $region21
    $region20: #{tpu_custom_call.1} parent=1 // pred_region
      %52 = dma.done [#allocation4], 256
    $region21: #{tpu_custom_call.1} parent=1 // pred_fallthru
      _
    %53 = vsyncpa [#allocation3], 1
    %54 = vsyncpa [#allocation4], 1

</llo_original>
